<compile_context>
chip_gen: v5e
topology: v5e:2x2
jax: 0.10.0
libtpu: 0.0.40
codegen_flags: <defaults>
</compile_context>

<pallas_src>
import jax
import jax.numpy as jnp
from jax.experimental import pallas as pl
from jax.experimental.pallas import tpu as pltpu

HIDDEN = 32


def _critic_kernel(xT_ref, p_ref, b2_ref, out_ref):
    """One batch tile.

    xT_ref : (in_C, TILE_B)            VMEM  states, batch along lanes
    p_ref  : (HIDDEN, in_C+1+out_C)    VMEM  [W1 | b1 | W2^T] packed, resident
    b2_ref : (1, out_C)                SMEM  output bias scalars
    out_ref: (out_C, TILE_B)           VMEM  lane-dense critic values
    """
    xT = xT_ref[...]                          # (in_C, TILE_B) f32
    p = p_ref[...]                            # (HIDDEN, in_C+1+out_C) f32
    in_c, tile_b = xT.shape
    out_c = out_ref.shape[0]

    # ---- Layer 1 on the VPU: h = relu(W1 @ x^T + b1), shape (HIDDEN, TILE_B).
    # in_C (=4) broadcast-FMAs instead of an MXU matmul with K=4.
    h = jnp.broadcast_to(p[:, in_c:in_c + 1], (HIDDEN, tile_b))   # b1 column
    for k in range(in_c):                     # static, fully unrolled
        h = h + p[:, k:k + 1] * xT[k:k + 1, :]
    h = jnp.maximum(h, 0.0)                   # ReLU (VPU)

    # ---- Layer 2: out[c] = w2[c] . h + b2[c]  (VPU mul + XLU sublane reduce).
    for c in range(out_c):                    # out_c == 1 for the critic
        w2c = p[:, in_c + 1 + c:in_c + 2 + c]             # (HIDDEN, 1)
        oc = jnp.sum(h * w2c, axis=0, keepdims=True)      # (1, TILE_B)
        out_ref[c:c + 1, :] = (oc + b2_ref[0, c]).astype(out_ref.dtype)


def critic_net_forward(x, w1, b1, w2, b2, *, tile_b=None):
    """Fused critic MLP forward.

    x : (B, in_C) f32
    w1: (32, in_C), b1: (32,)          (PyTorch nn.Linear layout: [out, in])
    w2: (out_C, 32), b2: (out_C,)
    returns (B, out_C) f32
    """
    B, in_c = x.shape
    out_c = w2.shape[0]
    assert w1.shape == (HIDDEN, in_c) and w2.shape == (out_c, HIDDEN)

    if tile_b is None:
        tile_b = 512 if B >= 512 else 128     # >=128-lane tiles; bigger for rollouts
    b_pad = -(-B // tile_b) * tile_b
    n_tiles = b_pad // tile_b

    # Wrapper-side layout plumbing: batch onto the lane axis (one-time cost).
    x_pad = jnp.pad(x.astype(jnp.float32), ((0, b_pad - B), (0, 0)))
    xT = x_pad.T                                          # (in_C, B_pad)

    # Pack W1 | b1 | W2^T into a single tiny VMEM-resident params array.
    pw = in_c + 1 + out_c
    params = jnp.zeros((HIDDEN, pw), jnp.float32)
    params = params.at[:, :in_c].set(w1.astype(jnp.float32))
    params = params.at[:, in_c].set(b1.astype(jnp.float32))
    params = params.at[:, in_c + 1:].set(w2.astype(jnp.float32).T)

    b2_smem = b2.astype(jnp.float32).reshape(1, out_c)

    out_t = pl.pallas_call(
        _critic_kernel,
        out_shape=jax.ShapeDtypeStruct((out_c, b_pad), jnp.float32),
        grid=(n_tiles,),
        in_specs=[
            pl.BlockSpec((in_c, tile_b), lambda i: (0, i)),      # x^T batch tile
            pl.BlockSpec((HIDDEN, pw), lambda i: (0, 0)),        # params, resident
            pl.BlockSpec(memory_space=pltpu.MemorySpace.SMEM),   # b2 scalars
        ],
        out_specs=pl.BlockSpec((out_c, tile_b), lambda i: (0, i)),
        compiler_params=pltpu.CompilerParams(
            dimension_semantics=("parallel",)),
    )(xT, params, b2_smem)

    return out_t[:, :B].T                                  # (B, out_C)


def init_params(key, in_c, out_c):
    """PyTorch nn.Linear default init (uniform +-1/sqrt(fan_in)), torch layout."""
    k1, k2, k3, k4 = jax.random.split(key, 4)
    bound1 = 1.0 / jnp.sqrt(jnp.float32(in_c))
    bound2 = 1.0 / jnp.sqrt(jnp.float32(HIDDEN))
    w1 = jax.random.uniform(k1, (HIDDEN, in_c), jnp.float32, -bound1, bound1)
    b1 = jax.random.uniform(k2, (HIDDEN,), jnp.float32, -bound1, bound1)
    w2 = jax.random.uniform(k3, (out_c, HIDDEN), jnp.float32, -bound2, bound2)
    b2 = jax.random.uniform(k4, (out_c,), jnp.float32, -bound2, bound2)
    return w1, b1, w2, b2


if __name__ == "__main__":
    # Cart-pole critic: state dim 4, scalar value; small rollout batch so the
    # batch grid (2 x 128-row lane-dense tiles) is actually exercised.
    B, in_C, out_C = 256, 4, 1

    key = jax.random.PRNGKey(0)
    kx, kp = jax.random.split(key)
    x = jax.random.normal(kx, (B, in_C), jnp.float32)
    w1, b1, w2, b2 = init_params(kp, in_C, out_C)

    out = critic_net_forward(x, w1, b1, w2, b2)
    jax.block_until_ready(out)

    # Pure-JAX reference of the same math (torch-layout weights).
    ref = jnp.maximum(x @ w1.T + b1[None, :], 0.0) @ w2.T + b2[None, :]
    assert out.shape == (B, out_C)
    assert jnp.allclose(out, ref, atol=1e-5, rtol=1e-5), float(
        jnp.max(jnp.abs(out - ref)))

    print("KERNEL_OK")
</pallas_src>

<mosaic_0001>
module attributes {stable_mosaic.version = 11 : i64} {
  func.func @_critic_kernel(%arg0: i32, %arg1: memref<4x128xf32, #tpu.memory_space<vmem>>, %arg2: memref<32x6xf32, #tpu.memory_space<vmem>>, %arg3: memref<1x1xf32, #tpu.memory_space<smem>>, %arg4: memref<1x128xf32, #tpu.memory_space<vmem>>) attributes {dimension_semantics = [#tpu.dimension_semantics<parallel>], iteration_bounds = array<i64: 2>, scalar_prefetch = 0 : i64, scratch_operands = 0 : i64, tpu.core_type = #tpu.core_type<tc>, window_params = [{transform_indices = @transform_0, window_bounds = array<i64: 4, 128>}, {pipeline_mode = #tpu.pipeline_mode<synchronous>, transform_indices = @transform_1, window_bounds = array<i64: 32, 6>}, {transform_indices = @transform_2, window_bounds = array<i64: 1, 1>}, {transform_indices = @transform_3, window_bounds = array<i64: 1, 128>}]} {
    %c0 = arith.constant 0 : index
    %c0_0 = arith.constant 0 : index
    %0 = vector.load %arg1[%c0, %c0_0] : memref<4x128xf32, #tpu.memory_space<vmem>>, vector<4x128xf32>
    %c0_1 = arith.constant 0 : index
    %c0_2 = arith.constant 0 : index
    %1 = vector.load %arg2[%c0_1, %c0_2] : memref<32x6xf32, #tpu.memory_space<vmem>>, vector<32x6xf32>
    %2 = vector.extract_strided_slice %1 {offsets = [0, 4], sizes = [32, 1], strides = [1, 1]} : vector<32x6xf32> to vector<32x1xf32>
    %3 = vector.shape_cast %2 : vector<32x1xf32> to vector<32x1xf32>
    %4 = vector.broadcast %3 : vector<32x1xf32> to vector<32x128xf32>
    %5 = vector.extract_strided_slice %1 {offsets = [0, 0], sizes = [32, 1], strides = [1, 1]} : vector<32x6xf32> to vector<32x1xf32>
    %6 = vector.extract_strided_slice %0 {offsets = [0, 0], sizes = [1, 128], strides = [1, 1]} : vector<4x128xf32> to vector<1x128xf32>
    %7 = vector.broadcast %5 : vector<32x1xf32> to vector<32x128xf32>
    %8 = vector.broadcast %6 : vector<1x128xf32> to vector<32x128xf32>
    %9 = arith.mulf %7, %8 : vector<32x128xf32>
    %10 = arith.addf %4, %9 : vector<32x128xf32>
    %11 = vector.extract_strided_slice %1 {offsets = [0, 1], sizes = [32, 1], strides = [1, 1]} : vector<32x6xf32> to vector<32x1xf32>
    %12 = vector.extract_strided_slice %0 {offsets = [1, 0], sizes = [1, 128], strides = [1, 1]} : vector<4x128xf32> to vector<1x128xf32>
    %13 = vector.broadcast %11 : vector<32x1xf32> to vector<32x128xf32>
    %14 = vector.broadcast %12 : vector<1x128xf32> to vector<32x128xf32>
    %15 = arith.mulf %13, %14 : vector<32x128xf32>
    %16 = arith.addf %10, %15 : vector<32x128xf32>
    %17 = vector.extract_strided_slice %1 {offsets = [0, 2], sizes = [32, 1], strides = [1, 1]} : vector<32x6xf32> to vector<32x1xf32>
    %18 = vector.extract_strided_slice %0 {offsets = [2, 0], sizes = [1, 128], strides = [1, 1]} : vector<4x128xf32> to vector<1x128xf32>
    %19 = vector.broadcast %17 : vector<32x1xf32> to vector<32x128xf32>
    %20 = vector.broadcast %18 : vector<1x128xf32> to vector<32x128xf32>
    %21 = arith.mulf %19, %20 : vector<32x128xf32>
    %22 = arith.addf %16, %21 : vector<32x128xf32>
    %23 = vector.extract_strided_slice %1 {offsets = [0, 3], sizes = [32, 1], strides = [1, 1]} : vector<32x6xf32> to vector<32x1xf32>
    %24 = vector.extract_strided_slice %0 {offsets = [3, 0], sizes = [1, 128], strides = [1, 1]} : vector<4x128xf32> to vector<1x128xf32>
    %25 = vector.broadcast %23 : vector<32x1xf32> to vector<32x128xf32>
    %26 = vector.broadcast %24 : vector<1x128xf32> to vector<32x128xf32>
    %27 = arith.mulf %25, %26 : vector<32x128xf32>
    %28 = arith.addf %22, %27 : vector<32x128xf32>
    %cst = arith.constant 0.000000e+00 : f32
    %29 = vector.broadcast %cst : f32 to vector<32x128xf32>
    %30 = arith.maximumf %28, %29 : vector<32x128xf32>
    %31 = vector.extract_strided_slice %1 {offsets = [0, 5], sizes = [32, 1], strides = [1, 1]} : vector<32x6xf32> to vector<32x1xf32>
    %32 = vector.broadcast %31 : vector<32x1xf32> to vector<32x128xf32>
    %33 = arith.mulf %30, %32 : vector<32x128xf32>
    %cst_3 = arith.constant dense<0.000000e+00> : vector<128xf32>
    %34 = vector.multi_reduction <add>, %33, %cst_3 [0] : vector<32x128xf32> to vector<128xf32>
    %35 = vector.shape_cast %34 : vector<128xf32> to vector<1x128xf32>
    %c0_4 = arith.constant 0 : index
    %c0_5 = arith.constant 0 : index
    %36 = memref.load %arg3[%c0_4, %c0_5] : memref<1x1xf32, #tpu.memory_space<smem>>
    %37 = vector.broadcast %36 : f32 to vector<1x128xf32>
    %38 = arith.addf %35, %37 : vector<1x128xf32>
    %c0_6 = arith.constant 0 : index
    %c0_7 = arith.constant 0 : index
    %39 = vector.load %arg4[%c0_6, %c0_7] : memref<1x128xf32, #tpu.memory_space<vmem>>, vector<1x128xf32>
    tpu.vector_store %arg4[%c0_6, %c0_7], %38 {strides = array<i32>} : memref<1x128xf32, #tpu.memory_space<vmem>>, vector<1x128xf32>,
    return
  }
  func.func @transform_0(%arg0: i32) -> (i32, i32) {
    %c0_i32 = arith.constant 0 : i32
    %c0_i32_0 = arith.constant 0 : i32
    return %c0_i32, %arg0 : i32, i32
  }
  func.func @transform_1(%arg0: i32) -> (i32, i32) {
    %c0_i32 = arith.constant 0 : i32
    %c0_i32_0 = arith.constant 0 : i32
    %c0_i32_1 = arith.constant 0 : i32
    return %c0_i32, %c0_i32_0 : i32, i32
  }
  func.func @transform_2(%arg0: i32) -> (i32, i32) {
    %c0_i32 = arith.constant 0 : i32
    %c0_i32_0 = arith.constant 0 : i32
    %c0_i32_1 = arith.constant 0 : i32
    return %c0_i32, %c0_i32_0 : i32, i32
  }
  func.func @transform_3(%arg0: i32) -> (i32, i32) {
    %c0_i32 = arith.constant 0 : i32
    %c0_i32_0 = arith.constant 0 : i32
    return %c0_i32, %arg0 : i32, i32
  }
}

</mosaic_0001>

<llo_original>
// kernel: tpu_custom_call.1
$region0: #{tpu_custom_call.1}
  #allocation0 [shape = 'u32[]', space=smem, size = 0x4, offset = 0x4, fixed_abs, tag = 'smem constant byte address 0x4 - core index']
  #allocation1 [shape = 'u32[72,128]{1,0:T(1,128)}', space=vmem, size = 0x9000, scoped, tag = 'internal scratch']
  #allocation2 [shape = 'f32[1,1]{1,0:T(1,128)S(6)}', space=smem, size = 0x200, scoped, tag = 'scoped memory for tpu_custom_call.1']
  %s0 = inlined_call_operand.vmem [shape: f32[4,256], index: 0, kind: input, shape index: {}]
  %s1 = inlined_call_operand.vmem [shape: f32[32,6], index: 1, kind: input, shape index: {}]
  %s2 = inlined_call_operand.<no memory space> [shape: f32[1,1], index: 2, kind: input, shape index: {}]
  %s3 = inlined_call_operand.hbm [shape: f32[1,256], index: 3, kind: output, shape index: {}]
  %s4 = sld [smem:[#allocation0]]
  $region45: #{tpu_custom_call.1} parent=0
    _
  %s6 = ssub.s32 1, %s4
  %s7 = scalar_select 0, %s6, %s4
  %8 = sst [smem:[#allocation2]] %s2
  $region1: #{tpu_custom_call.1} parent=0
    #allocation3 [shape = 'u8[1024]{0}', space=vmem, size = 0x400, scoped, tag = 'output window, operand 0']
    #allocation4 [shape = 's32[2]{0}', space=sflag, size = 0x8, scoped, tag = 'scoped memory for tpu_custom_call.1']
    %9 = vsyncpa [#allocation4], 0
    %s10 = scalar_lea.sflag [#allocation4], 1
    %11 = vsyncpa %s10, 0
    loop: start=0, step=1, limit=4
    $region2: #{tpu_custom_call.1} parent=1 // loop_pre_header
      _
    $region3: #{tpu_custom_call.1} parent=1 // loop_header
      %s13 = sphi 0, %s17
      %p14 = scmp.ge.s32.totalorder %s13, 4
      %s23 = sphi 0, %s25
      %s26 = sphi 0, %s23
      %s27 = sphi 0, %s26
      %s43 = sphi 0, %s27
      %s47 = sphi 0, %s47
      %s49 = sphi 0, %s47
      %s50 = sphi 0, %s49
      %s64 = sphi 0, %s50
      %s68 = sphi 0, %s68
      %s70 = sphi 0, %s68
      %s71 = sphi 0, %s70
      %s85 = sphi 0, %s71
      %s91 = sphi 0, %s93
      %s94 = sphi 0, %s91
      %s95 = sphi 0, %s94
      %s111 = sphi 0, %s95
    $region4: #{tpu_custom_call.1} parent=1 // loop_header_branch
      %16 = sbr.rel (%p14) target = $region8
    $region5: #{tpu_custom_call.1} parent=1 // loop_body
      %s18 = ssub.s32 %s13, 1
      %s19 = ssub.s32 %s13, 2
      %s20 = sadd.s32 %s13, 1
      %s21 = ssub.s32 %s13, %s20
      %p22 = scmp.eq.s32.totalorder %s21, 0
      %s24 = sadd.s32 %s23, 1
      %s25 = scalar_select %p22, %s23, %s24
      %p28 = pneg %p22
      %p29 = scmp.eq.s32.totalorder %s13, 1
      %p30 = por %p28, %p29
      %p31 = scmp.ne.s32.totalorder %s23, %s26
      %p32 = scmp.eq.s32.totalorder %s13, 0
      %p33 = por %p31, %p32
      %p34 = scmp.ne.s32.totalorder %s23, %s26
      %p35 = scmp.eq.s32.totalorder %s18, 1
      %p36 = por %p34, %p35
      %p37 = scmp.ne.s32.totalorder %s26, %s27
      %p38 = scmp.eq.s32.totalorder %s18, 0
      %p39 = por %p37, %p38
      %p40 = scmp.ne.s32.totalorder %s26, %s27
      %p41 = scmp.eq.s32.totalorder %s19, 1
      %p42 = por %p40, %p41
      %p44 = scmp.ne.s32.totalorder %s27, %s43
      %p45 = scmp.eq.s32.totalorder %s19, 0
      %p46 = por %p44, %p45
      %s48 = sadd.s32 %s47, 1
      %p51 = scmp.eq.s32.totalorder %s13, 1
      %p52 = scmp.ne.s32.totalorder %s47, %s49
      %p53 = scmp.eq.s32.totalorder %s13, 0
      %p54 = por %p52, %p53
      %p55 = scmp.ne.s32.totalorder %s47, %s49
      %p56 = scmp.eq.s32.totalorder %s18, 1
      %p57 = por %p55, %p56
      %p58 = scmp.ne.s32.totalorder %s49, %s50
      %p59 = scmp.eq.s32.totalorder %s18, 0
      %p60 = por %p58, %p59
      %p61 = scmp.ne.s32.totalorder %s49, %s50
      %p62 = scmp.eq.s32.totalorder %s19, 1
      %p63 = por %p61, %p62
      %p65 = scmp.ne.s32.totalorder %s50, %s64
      %p66 = scmp.eq.s32.totalorder %s19, 0
      %p67 = por %p65, %p66
      %s69 = sadd.s32 %s68, 1
      %p72 = scmp.eq.s32.totalorder %s13, 1
      %p73 = scmp.ne.s32.totalorder %s68, %s70
      %p74 = scmp.eq.s32.totalorder %s13, 0
      %p75 = por %p73, %p74
      %p76 = scmp.ne.s32.totalorder %s68, %s70
      %p77 = scmp.eq.s32.totalorder %s18, 1
      %p78 = por %p76, %p77
      %p79 = scmp.ne.s32.totalorder %s70, %s71
      %p80 = scmp.eq.s32.totalorder %s18, 0
      %p81 = por %p79, %p80
      %p82 = scmp.ne.s32.totalorder %s70, %s71
      %p83 = scmp.eq.s32.totalorder %s19, 1
      %p84 = por %p82, %p83
      %p86 = scmp.ne.s32.totalorder %s71, %s85
      %p87 = scmp.eq.s32.totalorder %s19, 0
      %p88 = por %p86, %p87
      %s89 = ssub.s32 %s13, %s20
      %p90 = scmp.eq.s32.totalorder %s89, 0
      %s92 = sadd.s32 %s91, 1
      %s93 = scalar_select %p90, %s91, %s92
      %p96 = pneg %p90
      %p97 = scmp.eq.s32.totalorder %s13, 1
      %p98 = por %p96, %p97
      %p99 = scmp.ne.s32.totalorder %s91, %s94
      %p100 = scmp.eq.s32.totalorder %s13, 0
      %p101 = por %p99, %p100
      %p102 = scmp.ne.s32.totalorder %s91, %s94
      %p103 = scmp.eq.s32.totalorder %s18, 1
      %p104 = por %p102, %p103
      %p105 = scmp.ne.s32.totalorder %s94, %s95
      %p106 = scmp.eq.s32.totalorder %s18, 0
      %p107 = por %p105, %p106
      %p108 = scmp.ne.s32.totalorder %s94, %s95
      %p109 = scmp.eq.s32.totalorder %s19, 1
      %p110 = por %p108, %p109
      %p112 = scmp.ne.s32.totalorder %s95, %s111
      %p113 = scmp.eq.s32.totalorder %s19, 0
      %p114 = por %p112, %p113
      %p115 = scmp.le.s32.totalorder 1, %s13
      %p116 = scmp.lt.s32.totalorder %s13, 3
      %p117 = pnand %p115, %p116
      %p118 = pneg %p117
      // Predicated region
      $region9: #{tpu_custom_call.1} parent=5 // pred_check
        _
      $region10: #{tpu_custom_call.1} parent=5 // pred_check_branch
        %120 = sbr.rel (%p117) target = $region12
      $region11: #{tpu_custom_call.1} parent=5 // pred_region
        %s121 = ssub.s32 %s13, 1
        // Predicated region
        $region13: #{tpu_custom_call.1} parent=11 // pred_check
          %p122 = pneg %p60
        $region14: #{tpu_custom_call.1} parent=11 // pred_check_branch
          %124 = sbr.rel (%p122) target = $region16
        $region15: #{tpu_custom_call.1} parent=11 // pred_region
          _
        $region16: #{tpu_custom_call.1} parent=11 // pred_fallthru
          _
        // Predicated region
        $region17: #{tpu_custom_call.1} parent=11 // pred_check
          %p125 = pneg %p81
        $region18: #{tpu_custom_call.1} parent=11 // pred_check_branch
          %127 = sbr.rel (%p125) target = $region20
        $region19: #{tpu_custom_call.1} parent=11 // pred_region
          _
        $region20: #{tpu_custom_call.1} parent=11 // pred_fallthru
          _
      $region12: #{tpu_custom_call.1} parent=5 // pred_fallthru
        _
      %p128 = scmp.lt.s32.totalorder %s13, 2
      // Predicated region
      $region21: #{tpu_custom_call.1} parent=5 // pred_check
        %p129 = pneg %p128
      $region22: #{tpu_custom_call.1} parent=5 // pred_check_branch
        %131 = sbr.rel (%p129) target = $region24
      $region23: #{tpu_custom_call.1} parent=5 // pred_region
        // Predicated region
        $region25: #{tpu_custom_call.1} parent=23 // pred_check
          %p132 = pneg %p33
        $region26: #{tpu_custom_call.1} parent=23 // pred_check_branch
          %134 = sbr.rel (%p132) target = $region28
        $region27: #{tpu_custom_call.1} parent=23 // pred_region
          %p135 = scmp.lt.s32.totalorder %s13, 1
          %s136 = scalar_select %p135, %s13, 1
          %s137 = smul.addr %s136, 4
          %s138 = scalar_lea.vmem %s0, %s137
        $region28: #{tpu_custom_call.1} parent=23 // pred_fallthru
          _
      $region24: #{tpu_custom_call.1} parent=5 // pred_fallthru
        _
      %p139 = scmp.le.s32.totalorder 1, %s13
      %p140 = scmp.lt.s32.totalorder %s13, 3
      %p141 = pnand %p139, %p140
      %p142 = pneg %p141
      // Predicated region
      $region29: #{tpu_custom_call.1} parent=5 // pred_check
        _
      $region30: #{tpu_custom_call.1} parent=5 // pred_check_branch
        %144 = sbr.rel (%p141) target = $region32
      $region31: #{tpu_custom_call.1} parent=5 // pred_region
        %s145 = ssub.s32 %s13, 1
        %p146 = scmp.lt.s32.totalorder %s18, 1
        %s147 = scalar_select %p146, %s18, 1
        %s148 = smul.addr %s147, 4
        %s149 = scalar_lea.vmem %s0, %s148
        %p150 = pneg %p39
        %p151 = pneg %p36
        %p152 = pneg %p60
        %p153 = pneg %p57
        %p154 = pneg %p81
        %p155 = pneg %p78
        %p156 = pneg %p107
        %p157 = pneg %p104
        %s158 = sand.u32 %s94, 1
        %s159 = scalar_lea.sflag [#allocation4], %s158
        %s160 = sand.u32 %s94, 1
        %s161 = scalar_lea.vmem [#allocation3], %s160
        %p162 = scmp.lt.s32.totalorder %s18, 1
        %s163 = scalar_select %p162, %s18, 1
        %s164 = smul.addr %s163, 4
        %s165 = scalar_lea.vmem %s0, %s164
        %v166 = vld [vmem:[%s165] sm:$0xf]
        %v167 = vld [vmem:[%s1] sm:$0xff]
        %v168 = vld [vmem:[%s1 + $0x8] sm:$0xff]
        %v169 = vld [vmem:[%s1 + $0x10] sm:$0xff]
        %v170 = vld [vmem:[%s1 + $0x18] sm:$0xff]
        %172 = vset.pattern.permute.xlu0 4
        %173 = vperm.xlu0 %172, %v167
        %v174 = vpop.permute.xlu0 %173
        %177 = vset.pattern.permute.xlu0 4
        %178 = vperm.xlu0 %177, %v168
        %v179 = vpop.permute.xlu0 %178
        %182 = vset.pattern.permute.xlu0 4
        %183 = vperm.xlu0 %182, %v169
        %v184 = vpop.permute.xlu0 %183
        %187 = vset.pattern.permute.xlu0 4
        %188 = vperm.xlu0 %187, %v170
        %v189 = vpop.permute.xlu0 %188
        %191 = vset.pattern.permute.xlu0 0
        %192 = vperm.xlu0 %191, %v167
        %v193 = vpop.permute.xlu0 %192
        %195 = vset.pattern.permute.xlu0 0
        %196 = vperm.xlu0 %195, %v168
        %v197 = vpop.permute.xlu0 %196
        %199 = vset.pattern.permute.xlu0 0
        %200 = vperm.xlu0 %199, %v169
        %v201 = vpop.permute.xlu0 %200
        %203 = vset.pattern.permute.xlu0 0
        %204 = vperm.xlu0 %203, %v170
        %v205 = vpop.permute.xlu0 %204
        %v207 = vperm.slane %v166, 0
        %v208 = vmul.f32 %v193, %v207
        %v209 = vmul.f32 %v197, %v207
        %v210 = vmul.f32 %v201, %v207
        %v211 = vmul.f32 %v205, %v207
        %v212 = vadd.f32 %v174, %v208
        %v213 = vadd.f32 %v179, %v209
        %v214 = vadd.f32 %v184, %v210
        %v215 = vadd.f32 %v189, %v211
        %216 = vset.pattern.permute.xlu0 1
        %217 = vperm.xlu0 %216, %v167
        %v218 = vpop.permute.xlu0 %217
        %220 = vset.pattern.permute.xlu0 1
        %221 = vperm.xlu0 %220, %v168
        %v222 = vpop.permute.xlu0 %221
        %224 = vset.pattern.permute.xlu0 1
        %225 = vperm.xlu0 %224, %v169
        %v226 = vpop.permute.xlu0 %225
        %228 = vset.pattern.permute.xlu0 1
        %229 = vperm.xlu0 %228, %v170
        %v230 = vpop.permute.xlu0 %229
        %v232 = vperm.slane %v166, 1
        %v233 = vmul.f32 %v218, %v232
        %v234 = vmul.f32 %v222, %v232
        %v235 = vmul.f32 %v226, %v232
        %v236 = vmul.f32 %v230, %v232
        %v237 = vadd.f32 %v212, %v233
        %v238 = vadd.f32 %v213, %v234
        %v239 = vadd.f32 %v214, %v235
        %v240 = vadd.f32 %v215, %v236
        %241 = vset.pattern.permute.xlu0 2
        %242 = vperm.xlu0 %241, %v167
        %v243 = vpop.permute.xlu0 %242
        %245 = vset.pattern.permute.xlu0 2
        %246 = vperm.xlu0 %245, %v168
        %v247 = vpop.permute.xlu0 %246
        %249 = vset.pattern.permute.xlu0 2
        %250 = vperm.xlu0 %249, %v169
        %v251 = vpop.permute.xlu0 %250
        %253 = vset.pattern.permute.xlu0 2
        %254 = vperm.xlu0 %253, %v170
        %v255 = vpop.permute.xlu0 %254
        %v257 = vperm.slane %v166, 2
        %v258 = vmul.f32 %v243, %v257
        %v259 = vmul.f32 %v247, %v257
        %v260 = vmul.f32 %v251, %v257
        %v261 = vmul.f32 %v255, %v257
        %v262 = vadd.f32 %v237, %v258
        %v263 = vadd.f32 %v238, %v259
        %v264 = vadd.f32 %v239, %v260
        %v265 = vadd.f32 %v240, %v261
        %266 = vset.pattern.permute.xlu0 3
        %267 = vperm.xlu0 %266, %v167
        %v268 = vpop.permute.xlu0 %267
        %270 = vset.pattern.permute.xlu0 3
        %271 = vperm.xlu0 %270, %v168
        %v272 = vpop.permute.xlu0 %271
        %274 = vset.pattern.permute.xlu0 3
        %275 = vperm.xlu0 %274, %v169
        %v276 = vpop.permute.xlu0 %275
        %278 = vset.pattern.permute.xlu0 3
        %279 = vperm.xlu0 %278, %v170
        %v280 = vpop.permute.xlu0 %279
        %v282 = vperm.slane %v166, 3
        %v283 = vmul.f32 %v268, %v282
        %v284 = vmul.f32 %v272, %v282
        %v285 = vmul.f32 %v276, %v282
        %v286 = vmul.f32 %v280, %v282
        %v287 = vadd.f32 %v262, %v283
        %v288 = vadd.f32 %v263, %v284
        %v289 = vadd.f32 %v264, %v285
        %v290 = vadd.f32 %v265, %v286
        %v291 = vmax.f32 %v287, 0.0
        %v292 = vmax.f32 %v288, 0.0
        %v293 = vmax.f32 %v289, 0.0
        %v294 = vmax.f32 %v290, 0.0
        %295 = vset.pattern.permute.xlu0 5
        %296 = vperm.xlu0 %295, %v167
        %v297 = vpop.permute.xlu0 %296
        %299 = vset.pattern.permute.xlu0 5
        %300 = vperm.xlu0 %299, %v168
        %v301 = vpop.permute.xlu0 %300
        %303 = vset.pattern.permute.xlu0 5
        %304 = vperm.xlu0 %303, %v169
        %v305 = vpop.permute.xlu0 %304
        %307 = vset.pattern.permute.xlu0 5
        %308 = vperm.xlu0 %307, %v170
        %v309 = vpop.permute.xlu0 %308
        %v311 = vmul.f32 %v291, %v297
        %v312 = vmul.f32 %v292, %v301
        %v313 = vmul.f32 %v293, %v305
        %v314 = vmul.f32 %v294, %v309
        %v315 = vadd.f32 %v311, %v312
        %v316 = vadd.f32 %v315, %v313
        %v317 = vadd.f32 %v316, %v314
        %v318 = vrot.slane %v317, 4
        %v319 = vadd.f32 %v317, %v318
        %v320 = vrot.slane %v319, 2
        %v321 = vadd.f32 %v319, %v320
        %v322 = vrot.slane %v321, 1
        %v323 = vadd.f32 %v321, %v322
        %s324 = sld [smem:[#allocation2]]
        %v325 = vstv %s324
        %v326 = vadd.f32 %v323, %v325
        %327 = vst [vmem:[%s161] sm:$0x1] %v326
        %s328 = sand.u32 %s94, 1
        %s329 = scalar_lea.sflag [#allocation4], %s328
        %s330 = sand.u32 %s94, 1
        %s331 = scalar_lea.vmem [#allocation3], %s330
        // Predicated region
        $region33: #{tpu_custom_call.1} parent=31 // pred_check
          %p332 = pneg %p104
        $region34: #{tpu_custom_call.1} parent=31 // pred_check_branch
          %334 = sbr.rel (%p332) target = $region36
        $region35: #{tpu_custom_call.1} parent=31 // pred_region
          %336 = vsyncadd %s329, 0
          %s337 = scalar_lea.hbm %s3, %s18
          %s339 = sshll.u32 %s331, 4
          %s340 = int_to_ptr.vmem [resolvable:$true] %s339
          %s341 = sshll.u32 %s337, 4
          %s342 = int_to_ptr.hbm [resolvable:$true] %s341
          %344 = dma.vmem_to_hbm [thread:$0]  %s340, 16, %s342, %s329
        $region36: #{tpu_custom_call.1} parent=31 // pred_fallthru
          _
      $region32: #{tpu_custom_call.1} parent=5 // pred_fallthru
        _
      %p345 = scmp.le.s32.totalorder 2, %s13
      // Predicated region
      $region37: #{tpu_custom_call.1} parent=5 // pred_check
        %p346 = pneg %p345
      $region38: #{tpu_custom_call.1} parent=5 // pred_check_branch
        %348 = sbr.rel (%p346) target = $region40
      $region39: #{tpu_custom_call.1} parent=5 // pred_region
        %s349 = ssub.s32 %s13, 2
        // Predicated region
        $region41: #{tpu_custom_call.1} parent=39 // pred_check
          %p350 = pneg %p110
        $region42: #{tpu_custom_call.1} parent=39 // pred_check_branch
          %352 = sbr.rel (%p350) target = $region44
        $region43: #{tpu_custom_call.1} parent=39 // pred_region
          %s353 = sand.u32 %s95, 1
          %s354 = scalar_lea.sflag [#allocation4], %s353
          %s355 = sand.u32 %s95, 1
          %s356 = scalar_lea.vmem [#allocation3], %s355
          %358 = dma.done %s354, 16
        $region44: #{tpu_custom_call.1} parent=39 // pred_fallthru
          _
      $region40: #{tpu_custom_call.1} parent=5 // pred_fallthru
        _
    $region6: #{tpu_custom_call.1} parent=1 // loop_footer
      %s17 = sadd.s32 1, %s13
    $region7: #{tpu_custom_call.1} parent=1 // loop_footer_branch
      %12 = sbr.rel target = $region3
    $region8: #{tpu_custom_call.1} parent=1 // loop_exit
      _
    %359 = vsyncpa [#allocation4], 1
    %s360 = scalar_lea.sflag [#allocation4], 1
    %361 = vsyncpa %s360, 1

</llo_original>
